<compile_context>
chip_gen: v7x
topology: tpu7x:2x2x1
jax: 0.10.0
libtpu: 0.0.40
codegen_flags: <defaults>
</compile_context>

<pallas_src>
import jax
import jax.numpy as jnp
import numpy as np
from jax.experimental import pallas as pl
from jax.experimental.pallas import tpu as pltpu

EPS = 1e-5


# ---------------- fused Pallas kernel ------------------------------------------

def _fused_block_kernel(x_ref, w0_ref, w1_ref, wt_ref, p_ref, o_ref, h_scr):
    B, L, Cin = x_ref.shape
    Co = o_ref.shape[-1]
    T = L // 2

    # packed per-channel params: rows = [b0, g0, be0, b1, g1, be1, bt, 0]
    p = p_ref[...]
    b0, g0, be0 = p[0:1, :], p[1:2, :], p[2:3, :]
    b1, g1, be1 = p[3:4, :], p[4:5, :], p[5:6, :]
    bt = p[6:7, :]

    def shift_dn(v):
        # out[:, s, :] = v[:, s-1, :], zeros at s == 0  (conv zero padding)
        return jnp.concatenate([jnp.zeros_like(v[:, :1, :]), v[:, :-1, :]], axis=1)

    def shift_up(v):
        # out[:, s, :] = v[:, s+1, :], zeros at s == S-1
        return jnp.concatenate([v[:, 1:, :], jnp.zeros_like(v[:, :1, :])], axis=1)

    def conv3(v3, w_ref, bias):
        # Conv1d(k=3, stride=1, pad=1) as ONE fused MXU matmul: concatenate the
        # three shifted taps on the lane axis -> contraction 3*C.
        b, s, c = v3.shape
        cat = jnp.concatenate([shift_dn(v3), v3, shift_up(v3)], axis=-1)
        y = jnp.dot(cat.reshape(b * s, 3 * c).astype(jnp.bfloat16), w_ref[...],
                    preferred_element_type=jnp.float32)
        return y + bias                                    # (b*s, Co) f32

    def bnorm(h2, g, be):
        # BatchNorm1d training-mode batch stats, single pass over h.
        inv_n = 1.0 / h2.shape[0]
        mean = jnp.sum(h2, axis=0, keepdims=True) * inv_n
        msq = jnp.sum(h2 * h2, axis=0, keepdims=True) * inv_n
        var = msq - mean * mean
        scale = g * jax.lax.rsqrt(var + EPS)
        return h2 * scale + (be - mean * scale)

    x = x_ref[...]                                         # (B, L, Cin) f32

    # conv_00 -> ReLU -> norm_00
    h = conv3(x, w0_ref, b0)
    h = jnp.maximum(h, 0.0)
    h = bnorm(h, g0, be0)

    # conv_01 -> ReLU -> norm_01
    h = conv3(h.reshape(B, L, Co), w1_ref, b1)
    h = jnp.maximum(h, 0.0)
    h = bnorm(h, g1, be1)                                  # (B*L, Co) f32

    # transform_00: Conv1d(k=4, stride=2, pad=1)
    #   y[t] = W0 h[2t-1] + W1 h[2t] + W2 h[2t+1] + W3 h[2t+2] + b
    # In-kernel even/odd deinterleave: park h in a VMEM scratch and read it
    # back with stride-2 sublane loads (flat row index = b*L + l, L even, so
    # row parity == l parity and row order stays (b, t)-major).
    h_scr[...] = h
    he = h_scr[pl.ds(0, B * T, stride=2), :].reshape(B, T, Co)   # h[:, 2t]
    ho = h_scr[pl.ds(1, B * T, stride=2), :].reshape(B, T, Co)   # h[:, 2t+1]

    cat = jnp.concatenate([shift_dn(ho), he, ho, shift_up(he)], axis=-1)  # (B,T,4Co)
    y = jnp.dot(cat.reshape(B * T, 4 * Co).astype(jnp.bfloat16), wt_ref[...],
                preferred_element_type=jnp.float32) + bt
    o_ref[...] = y.reshape(B, T, Co)


# ---------------- wrapper ------------------------------------------------------

def block_forward(x_ncl, params):
    (w0, b0, g0, be0, w1, b1, g1, be1, wt, bt) = params
    B, Cin, L = x_ncl.shape
    Cout = w0.shape[0]
    assert L % 2 == 0
    T = L // 2

    # layout glue: NCL -> NLC (channels on lanes)
    x_nlc = jnp.transpose(x_ncl, (0, 2, 1)).astype(jnp.float32)

    # PyTorch (Cout, Cin, K) conv weights -> stacked (K*Cin, Cout) matmul weights
    # (bf16 operands; accumulation stays f32 inside the kernel).
    w0s = jnp.transpose(w0, (2, 1, 0)).reshape(3 * Cin, Cout).astype(jnp.bfloat16)
    w1s = jnp.transpose(w1, (2, 1, 0)).reshape(3 * Cout, Cout).astype(jnp.bfloat16)
    wts = jnp.transpose(wt, (2, 1, 0)).reshape(4 * Cout, Cout).astype(jnp.bfloat16)

    # pack the 7 per-channel vectors into one (8, Cout) input
    pvec = jnp.stack([b0, g0, be0, b1, g1, be1, bt, jnp.zeros_like(bt)],
                     axis=0).astype(jnp.float32)

    vmem = pl.BlockSpec(memory_space=pltpu.MemorySpace.VMEM)
    y_nlc = pl.pallas_call(
        _fused_block_kernel,
        out_shape=jax.ShapeDtypeStruct((B, T, Cout), jnp.float32),
        in_specs=[vmem] * 5,
        out_specs=vmem,
        scratch_shapes=[pltpu.VMEM((B * L, Cout), jnp.float32)],
    )(x_nlc, w0s, w1s, wts, pvec)

    return jnp.transpose(y_nlc, (0, 2, 1))

# TODO(synk): block_type='up' (ConvTranspose1d transform) is not implemented;
# this kernel covers the default block_type='down' path only.


# ---------------- pure-JAX reference (PyTorch semantics, NCL layout) -----------

def ref_forward(x_ncl, params):
    (w0, b0, g0, be0, w1, b1, g1, be1, wt, bt) = params

    def conv1d(x, w, b, stride, padding):
        y = jax.lax.conv_general_dilated(
            x, w, window_strides=(stride,), padding=[(padding, padding)],
            dimension_numbers=("NCH", "OIH", "NCH"),
            precision=jax.lax.Precision.HIGHEST)   # reference only (f32 ground truth)
        return y + b[None, :, None]

    def bn(x, g, be):
        m = jnp.mean(x, axis=(0, 2), keepdims=True)
        v = jnp.mean((x - m) ** 2, axis=(0, 2), keepdims=True)
        return (x - m) / jnp.sqrt(v + EPS) * g[None, :, None] + be[None, :, None]

    h = jax.nn.relu(conv1d(x_ncl, w0, b0, 1, 1))
    h = bn(h, g0, be0)
    h = jax.nn.relu(conv1d(h, w1, b1, 1, 1))
    h = bn(h, g1, be1)
    return conv1d(h, wt, bt, 2, 1)


def init_params(keys, in_dim, out_dim):
    w0 = 0.3 * jax.random.normal(keys[0], (out_dim, in_dim, 3), jnp.float32)
    b0 = 0.1 * jax.random.normal(keys[1], (out_dim,), jnp.float32)
    g0 = 1.0 + 0.1 * jax.random.normal(keys[2], (out_dim,), jnp.float32)
    be0 = 0.1 * jax.random.normal(keys[3], (out_dim,), jnp.float32)
    w1 = 0.3 * jax.random.normal(keys[4], (out_dim, out_dim, 3), jnp.float32)
    b1 = 0.1 * jax.random.normal(keys[5], (out_dim,), jnp.float32)
    g1 = 1.0 + 0.1 * jax.random.normal(keys[6], (out_dim,), jnp.float32)
    be1 = 0.1 * jax.random.normal(keys[7], (out_dim,), jnp.float32)
    wt = 0.3 * jax.random.normal(keys[8], (out_dim, out_dim, 4), jnp.float32)
    bt = 0.1 * jax.random.normal(keys[9], (out_dim,), jnp.float32)
    return (w0, b0, g0, be0, w1, b1, g1, be1, wt, bt)


if __name__ == "__main__":
    B, IN_DIM, OUT_DIM, L = 2, 8, 16, 64
    key = jax.random.PRNGKey(0)
    keys = jax.random.split(key, 11)
    x = jax.random.normal(keys[0], (B, IN_DIM, L), jnp.float32)   # NCL like PyTorch
    params = init_params(keys[1:], IN_DIM, OUT_DIM)

    y = jax.jit(block_forward)(x, params)
    y = jax.block_until_ready(y)

    y_ref = ref_forward(x, params)
    assert y.shape == (B, OUT_DIM, L // 2), y.shape

    # Kernel matmuls use bf16 operands (f32 accumulation) per the perf feedback,
    # so check the max abs error against the output's dynamic range (2%).
    err = float(jnp.max(jnp.abs(y - y_ref)))
    scale = float(jnp.max(jnp.abs(y_ref)))
    assert err <= 2e-2 * scale, ("max abs err", err, "scale", scale)
    print("KERNEL_OK")
</pallas_src>

<mosaic_0001>
module attributes {stable_mosaic.version = 11 : i64} {
  func.func @_fused_block_kernel(%arg0: memref<2x64x8xf32, #tpu.memory_space<vmem>>, %arg1: memref<24x16xbf16, #tpu.memory_space<vmem>>, %arg2: memref<48x16xbf16, #tpu.memory_space<vmem>>, %arg3: memref<64x16xbf16, #tpu.memory_space<vmem>>, %arg4: memref<8x16xf32, #tpu.memory_space<vmem>>, %arg5: memref<2x32x16xf32, #tpu.memory_space<vmem>>, %arg6: memref<128x16xf32, #tpu.memory_space<vmem>>) attributes {dimension_semantics = [], scalar_prefetch = 0 : i64, scratch_operands = 1 : i64, tpu.core_type = #tpu.core_type<tc>} {
    %c0 = arith.constant 0 : index
    %c0_0 = arith.constant 0 : index
    %0 = vector.load %arg4[%c0, %c0_0] : memref<8x16xf32, #tpu.memory_space<vmem>>, vector<8x16xf32>
    %1 = vector.extract_strided_slice %0 {offsets = [0, 0], sizes = [1, 16], strides = [1, 1]} : vector<8x16xf32> to vector<1x16xf32>
    %2 = vector.extract_strided_slice %0 {offsets = [1, 0], sizes = [1, 16], strides = [1, 1]} : vector<8x16xf32> to vector<1x16xf32>
    %3 = vector.extract_strided_slice %0 {offsets = [2, 0], sizes = [1, 16], strides = [1, 1]} : vector<8x16xf32> to vector<1x16xf32>
    %4 = vector.extract_strided_slice %0 {offsets = [3, 0], sizes = [1, 16], strides = [1, 1]} : vector<8x16xf32> to vector<1x16xf32>
    %5 = vector.extract_strided_slice %0 {offsets = [4, 0], sizes = [1, 16], strides = [1, 1]} : vector<8x16xf32> to vector<1x16xf32>
    %6 = vector.extract_strided_slice %0 {offsets = [5, 0], sizes = [1, 16], strides = [1, 1]} : vector<8x16xf32> to vector<1x16xf32>
    %7 = vector.extract_strided_slice %0 {offsets = [6, 0], sizes = [1, 16], strides = [1, 1]} : vector<8x16xf32> to vector<1x16xf32>
    %c0_1 = arith.constant 0 : index
    %c0_2 = arith.constant 0 : index
    %c0_3 = arith.constant 0 : index
    %8 = vector.load %arg0[%c0_1, %c0_2, %c0_3] : memref<2x64x8xf32, #tpu.memory_space<vmem>>, vector<2x64x8xf32>
    %cst = arith.constant 0.000000e+00 : f32
    %9 = vector.broadcast %cst : f32 to vector<2x1x8xf32>
    %10 = vector.extract_strided_slice %8 {offsets = [0, 0, 0], sizes = [2, 63, 8], strides = [1, 1, 1]} : vector<2x64x8xf32> to vector<2x63x8xf32>
    %11 = tpu.concatenate %9, %10 in 1 : vector<2x1x8xf32>, vector<2x63x8xf32> -> vector<2x64x8xf32>
    %12 = vector.extract_strided_slice %8 {offsets = [0, 1, 0], sizes = [2, 63, 8], strides = [1, 1, 1]} : vector<2x64x8xf32> to vector<2x63x8xf32>
    %cst_4 = arith.constant 0.000000e+00 : f32
    %13 = vector.broadcast %cst_4 : f32 to vector<2x1x8xf32>
    %14 = tpu.concatenate %12, %13 in 1 : vector<2x63x8xf32>, vector<2x1x8xf32> -> vector<2x64x8xf32>
    %15 = tpu.concatenate %11, %8, %14 in 2 : vector<2x64x8xf32>, vector<2x64x8xf32>, vector<2x64x8xf32> -> vector<2x64x24xf32>
    %16 = vector.shape_cast %15 : vector<2x64x24xf32> to vector<128x24xf32>
    %17 = arith.truncf %16 : vector<128x24xf32> to vector<128x24xbf16>
    %c0_5 = arith.constant 0 : index
    %c0_6 = arith.constant 0 : index
    %18 = vector.load %arg1[%c0_5, %c0_6] : memref<24x16xbf16, #tpu.memory_space<vmem>>, vector<24x16xbf16>
    %cst_7 = arith.constant dense<0.000000e+00> : vector<128x16xf32>
    %19 = tpu.matmul %17, %18, %cst_7 {dimension_numbers = #tpu.dot_dimension_numbers<[1], [0], [0], [1], [0, 0, 1, 1], [], []>} : vector<128x24xbf16>, vector<24x16xbf16>, vector<128x16xf32> -> vector<128x16xf32>
    %20 = vector.broadcast %1 : vector<1x16xf32> to vector<128x16xf32>
    %21 = arith.addf %19, %20 : vector<128x16xf32>
    %cst_8 = arith.constant 0.000000e+00 : f32
    %22 = vector.broadcast %cst_8 : f32 to vector<128x16xf32>
    %23 = arith.maximumf %21, %22 : vector<128x16xf32>
    %cst_9 = arith.constant dense<0.000000e+00> : vector<16xf32>
    %24 = vector.multi_reduction <add>, %23, %cst_9 [0] : vector<128x16xf32> to vector<16xf32>
    %25 = vector.shape_cast %24 : vector<16xf32> to vector<1x16xf32>
    %cst_10 = arith.constant 7.812500e-03 : f32
    %26 = vector.broadcast %cst_10 : f32 to vector<1x16xf32>
    %27 = arith.mulf %25, %26 : vector<1x16xf32>
    %28 = arith.mulf %23, %23 : vector<128x16xf32>
    %cst_11 = arith.constant dense<0.000000e+00> : vector<16xf32>
    %29 = vector.multi_reduction <add>, %28, %cst_11 [0] : vector<128x16xf32> to vector<16xf32>
    %30 = vector.shape_cast %29 : vector<16xf32> to vector<1x16xf32>
    %cst_12 = arith.constant 7.812500e-03 : f32
    %31 = vector.broadcast %cst_12 : f32 to vector<1x16xf32>
    %32 = arith.mulf %30, %31 : vector<1x16xf32>
    %33 = arith.mulf %27, %27 : vector<1x16xf32>
    %34 = arith.subf %32, %33 : vector<1x16xf32>
    %cst_13 = arith.constant 9.99999974E-6 : f32
    %35 = vector.broadcast %cst_13 : f32 to vector<1x16xf32>
    %36 = arith.addf %34, %35 : vector<1x16xf32>
    %37 = math.rsqrt %36 : vector<1x16xf32>
    %38 = arith.mulf %2, %37 : vector<1x16xf32>
    %39 = vector.broadcast %38 : vector<1x16xf32> to vector<128x16xf32>
    %40 = arith.mulf %23, %39 : vector<128x16xf32>
    %41 = arith.mulf %27, %38 : vector<1x16xf32>
    %42 = arith.subf %3, %41 : vector<1x16xf32>
    %43 = vector.broadcast %42 : vector<1x16xf32> to vector<128x16xf32>
    %44 = arith.addf %40, %43 : vector<128x16xf32>
    %45 = vector.shape_cast %44 : vector<128x16xf32> to vector<2x64x16xf32>
    %cst_14 = arith.constant 0.000000e+00 : f32
    %46 = vector.broadcast %cst_14 : f32 to vector<2x1x16xf32>
    %47 = vector.extract_strided_slice %45 {offsets = [0, 0, 0], sizes = [2, 63, 16], strides = [1, 1, 1]} : vector<2x64x16xf32> to vector<2x63x16xf32>
    %48 = tpu.concatenate %46, %47 in 1 : vector<2x1x16xf32>, vector<2x63x16xf32> -> vector<2x64x16xf32>
    %49 = vector.extract_strided_slice %45 {offsets = [0, 1, 0], sizes = [2, 63, 16], strides = [1, 1, 1]} : vector<2x64x16xf32> to vector<2x63x16xf32>
    %cst_15 = arith.constant 0.000000e+00 : f32
    %50 = vector.broadcast %cst_15 : f32 to vector<2x1x16xf32>
    %51 = tpu.concatenate %49, %50 in 1 : vector<2x63x16xf32>, vector<2x1x16xf32> -> vector<2x64x16xf32>
    %52 = tpu.concatenate %48, %45, %51 in 2 : vector<2x64x16xf32>, vector<2x64x16xf32>, vector<2x64x16xf32> -> vector<2x64x48xf32>
    %53 = vector.shape_cast %52 : vector<2x64x48xf32> to vector<128x48xf32>
    %54 = arith.truncf %53 : vector<128x48xf32> to vector<128x48xbf16>
    %c0_16 = arith.constant 0 : index
    %c0_17 = arith.constant 0 : index
    %55 = vector.load %arg2[%c0_16, %c0_17] : memref<48x16xbf16, #tpu.memory_space<vmem>>, vector<48x16xbf16>
    %cst_18 = arith.constant dense<0.000000e+00> : vector<128x16xf32>
    %56 = tpu.matmul %54, %55, %cst_18 {dimension_numbers = #tpu.dot_dimension_numbers<[1], [0], [0], [1], [0, 0, 1, 1], [], []>} : vector<128x48xbf16>, vector<48x16xbf16>, vector<128x16xf32> -> vector<128x16xf32>
    %57 = vector.broadcast %4 : vector<1x16xf32> to vector<128x16xf32>
    %58 = arith.addf %56, %57 : vector<128x16xf32>
    %cst_19 = arith.constant 0.000000e+00 : f32
    %59 = vector.broadcast %cst_19 : f32 to vector<128x16xf32>
    %60 = arith.maximumf %58, %59 : vector<128x16xf32>
    %cst_20 = arith.constant dense<0.000000e+00> : vector<16xf32>
    %61 = vector.multi_reduction <add>, %60, %cst_20 [0] : vector<128x16xf32> to vector<16xf32>
    %62 = vector.shape_cast %61 : vector<16xf32> to vector<1x16xf32>
    %cst_21 = arith.constant 7.812500e-03 : f32
    %63 = vector.broadcast %cst_21 : f32 to vector<1x16xf32>
    %64 = arith.mulf %62, %63 : vector<1x16xf32>
    %65 = arith.mulf %60, %60 : vector<128x16xf32>
    %cst_22 = arith.constant dense<0.000000e+00> : vector<16xf32>
    %66 = vector.multi_reduction <add>, %65, %cst_22 [0] : vector<128x16xf32> to vector<16xf32>
    %67 = vector.shape_cast %66 : vector<16xf32> to vector<1x16xf32>
    %cst_23 = arith.constant 7.812500e-03 : f32
    %68 = vector.broadcast %cst_23 : f32 to vector<1x16xf32>
    %69 = arith.mulf %67, %68 : vector<1x16xf32>
    %70 = arith.mulf %64, %64 : vector<1x16xf32>
    %71 = arith.subf %69, %70 : vector<1x16xf32>
    %cst_24 = arith.constant 9.99999974E-6 : f32
    %72 = vector.broadcast %cst_24 : f32 to vector<1x16xf32>
    %73 = arith.addf %71, %72 : vector<1x16xf32>
    %74 = math.rsqrt %73 : vector<1x16xf32>
    %75 = arith.mulf %5, %74 : vector<1x16xf32>
    %76 = vector.broadcast %75 : vector<1x16xf32> to vector<128x16xf32>
    %77 = arith.mulf %60, %76 : vector<128x16xf32>
    %78 = arith.mulf %64, %75 : vector<1x16xf32>
    %79 = arith.subf %6, %78 : vector<1x16xf32>
    %80 = vector.broadcast %79 : vector<1x16xf32> to vector<128x16xf32>
    %81 = arith.addf %77, %80 : vector<128x16xf32>
    %c0_25 = arith.constant 0 : index
    %c0_26 = arith.constant 0 : index
    %82 = vector.load %arg6[%c0_25, %c0_26] : memref<128x16xf32, #tpu.memory_space<vmem>>, vector<128x16xf32>
    tpu.vector_store %arg6[%c0_25, %c0_26], %81 {strides = array<i32>} : memref<128x16xf32, #tpu.memory_space<vmem>>, vector<128x16xf32>,
    %c0_27 = arith.constant 0 : index
    %c0_28 = arith.constant 0 : index
    %83 = tpu.strided_load %arg6[%c0_27, %c0_28] {strides = array<i32: 2, 1>} : memref<128x16xf32, #tpu.memory_space<vmem>>, vector<64x16xf32>
    %84 = vector.shape_cast %83 : vector<64x16xf32> to vector<2x32x16xf32>
    %c1 = arith.constant 1 : index
    %c0_29 = arith.constant 0 : index
    %85 = tpu.strided_load %arg6[%c1, %c0_29] {strides = array<i32: 2, 1>} : memref<128x16xf32, #tpu.memory_space<vmem>>, vector<64x16xf32>
    %86 = vector.shape_cast %85 : vector<64x16xf32> to vector<2x32x16xf32>
    %cst_30 = arith.constant 0.000000e+00 : f32
    %87 = vector.broadcast %cst_30 : f32 to vector<2x1x16xf32>
    %88 = vector.extract_strided_slice %86 {offsets = [0, 0, 0], sizes = [2, 31, 16], strides = [1, 1, 1]} : vector<2x32x16xf32> to vector<2x31x16xf32>
    %89 = tpu.concatenate %87, %88 in 1 : vector<2x1x16xf32>, vector<2x31x16xf32> -> vector<2x32x16xf32>
    %90 = vector.extract_strided_slice %84 {offsets = [0, 1, 0], sizes = [2, 31, 16], strides = [1, 1, 1]} : vector<2x32x16xf32> to vector<2x31x16xf32>
    %cst_31 = arith.constant 0.000000e+00 : f32
    %91 = vector.broadcast %cst_31 : f32 to vector<2x1x16xf32>
    %92 = tpu.concatenate %90, %91 in 1 : vector<2x31x16xf32>, vector<2x1x16xf32> -> vector<2x32x16xf32>
    %93 = tpu.concatenate %89, %84, %86, %92 in 2 : vector<2x32x16xf32>, vector<2x32x16xf32>, vector<2x32x16xf32>, vector<2x32x16xf32> -> vector<2x32x64xf32>
    %94 = vector.shape_cast %93 : vector<2x32x64xf32> to vector<64x64xf32>
    %95 = arith.truncf %94 : vector<64x64xf32> to vector<64x64xbf16>
    %c0_32 = arith.constant 0 : index
    %c0_33 = arith.constant 0 : index
    %96 = vector.load %arg3[%c0_32, %c0_33] : memref<64x16xbf16, #tpu.memory_space<vmem>>, vector<64x16xbf16>
    %cst_34 = arith.constant dense<0.000000e+00> : vector<64x16xf32>
    %97 = tpu.matmul %95, %96, %cst_34 {dimension_numbers = #tpu.dot_dimension_numbers<[1], [0], [0], [1], [0, 0, 1, 1], [], []>} : vector<64x64xbf16>, vector<64x16xbf16>, vector<64x16xf32> -> vector<64x16xf32>
    %98 = vector.broadcast %7 : vector<1x16xf32> to vector<64x16xf32>
    %99 = arith.addf %97, %98 : vector<64x16xf32>
    %100 = vector.shape_cast %99 : vector<64x16xf32> to vector<2x32x16xf32>
    %c0_35 = arith.constant 0 : index
    %c0_36 = arith.constant 0 : index
    %c0_37 = arith.constant 0 : index
    %101 = vector.load %arg5[%c0_35, %c0_36, %c0_37] : memref<2x32x16xf32, #tpu.memory_space<vmem>>, vector<2x32x16xf32>
    tpu.vector_store %arg5[%c0_35, %c0_36, %c0_37], %100 {strides = array<i32>} : memref<2x32x16xf32, #tpu.memory_space<vmem>>, vector<2x32x16xf32>,
    return
  }
}

</mosaic_0001>

<llo_original>
// kernel: block_forward.1
$region0: #{block_forward.1}
  #allocation0 [shape = 'u32[]', space=smem, size = 0x4, offset = 0x4, fixed_abs, tag = 'smem constant byte address 0x4 - core index']
  #allocation1 [shape = 'u32[144,128]{1,0:T(1,128)}', space=vmem, size = 0x12000, scoped, tag = 'internal scratch']
  #allocation2 [shape = 'f32[128,16]{1,0:T(8,128)}', space=vmem, size = 0x10000, scoped, tag = 'scratch operand']
  %s0 = inlined_call_operand.vmem [shape: f32[2,64,8], index: 0, kind: input, shape index: {}]
  %s1 = inlined_call_operand.vmem [shape: bf16[24,16], index: 1, kind: input, shape index: {}]
  %s2 = inlined_call_operand.vmem [shape: bf16[48,16], index: 2, kind: input, shape index: {}]
  %s3 = inlined_call_operand.vmem [shape: bf16[64,16], index: 3, kind: input, shape index: {}]
  %s4 = inlined_call_operand.vmem [shape: f32[8,16], index: 4, kind: input, shape index: {}]
  %s5 = inlined_call_operand.vmem [shape: f32[2,32,16], index: 5, kind: output, shape index: {}]
  %s6 = sld [smem:[#allocation0]]
  $region30: #{block_forward.1} parent=0
    _
  %s8 = ssub.s32 1, %s6
  %s9 = scalar_select 0, %s8, %s6
  // Predicated region
  $region2: #{block_forward.1} parent=0 // pred_check
    _
  $region3: #{block_forward.1} parent=0 // pred_check_branch
    %11 = sbr.rel (0) target = $region5
  $region4: #{block_forward.1} parent=0 // pred_region
    _
  $region5: #{block_forward.1} parent=0 // pred_fallthru
    _
  // Predicated region
  $region6: #{block_forward.1} parent=0 // pred_check
    _
  $region7: #{block_forward.1} parent=0 // pred_check_branch
    %13 = sbr.rel (0) target = $region9
  $region8: #{block_forward.1} parent=0 // pred_region
    _
  $region9: #{block_forward.1} parent=0 // pred_fallthru
    _
  // Predicated region
  $region10: #{block_forward.1} parent=0 // pred_check
    _
  $region11: #{block_forward.1} parent=0 // pred_check_branch
    %15 = sbr.rel (0) target = $region13
  $region12: #{block_forward.1} parent=0 // pred_region
    _
  $region13: #{block_forward.1} parent=0 // pred_fallthru
    _
  // Predicated region
  $region14: #{block_forward.1} parent=0 // pred_check
    _
  $region15: #{block_forward.1} parent=0 // pred_check_branch
    %17 = sbr.rel (0) target = $region17
  $region16: #{block_forward.1} parent=0 // pred_region
    _
  $region17: #{block_forward.1} parent=0 // pred_fallthru
    _
  // Predicated region
  $region18: #{block_forward.1} parent=0 // pred_check
    _
  $region19: #{block_forward.1} parent=0 // pred_check_branch
    %19 = sbr.rel (0) target = $region21
  $region20: #{block_forward.1} parent=0 // pred_region
    _
  $region21: #{block_forward.1} parent=0 // pred_fallthru
    _
  %v21 = vld [vmem:[%s4] sm:$0xff]
  %v22 = vld [vmem:[%s0] sm:$0xff]
  %v23 = vld [vmem:[%s0 + $0x8] sm:$0xff]
  %v24 = vld [vmem:[%s0 + $0x10] sm:$0xff]
  %v25 = vld [vmem:[%s0 + $0x18] sm:$0xff]
  %v26 = vld [vmem:[%s0 + $0x20] sm:$0xff]
  %v27 = vld [vmem:[%s0 + $0x28] sm:$0xff]
  %v28 = vld [vmem:[%s0 + $0x30] sm:$0xff]
  %v29 = vld [vmem:[%s0 + $0x38] sm:$0xff]
  %v30 = vld [vmem:[%s0 + $0x40] sm:$0xff]
  %v31 = vld [vmem:[%s0 + $0x48] sm:$0xff]
  %v32 = vld [vmem:[%s0 + $0x50] sm:$0xff]
  %v33 = vld [vmem:[%s0 + $0x58] sm:$0xff]
  %v34 = vld [vmem:[%s0 + $0x60] sm:$0xff]
  %v35 = vld [vmem:[%s0 + $0x68] sm:$0xff]
  %v36 = vld [vmem:[%s0 + $0x70] sm:$0xff]
  %v37 = vld [vmem:[%s0 + $0x78] sm:$0xff]
  %vm54 = vcmask 1040384
  %v55 = vrot.slane %v22, 7
  %v56 = vrot.slane %v23, 7
  %v57 = vsel %vm54, %v55, %v56
  %v58 = vrot.slane %v24, 7
  %v59 = vsel %vm54, %v56, %v58
  %v60 = vrot.slane %v25, 7
  %v61 = vsel %vm54, %v58, %v60
  %v62 = vrot.slane %v26, 7
  %v63 = vsel %vm54, %v60, %v62
  %v64 = vrot.slane %v27, 7
  %v65 = vsel %vm54, %v62, %v64
  %v66 = vrot.slane %v28, 7
  %v67 = vsel %vm54, %v64, %v66
  %v68 = vrot.slane %v29, 7
  %v69 = vsel %vm54, %v66, %v68
  %v70 = vrot.slane %v30, 7
  %v71 = vrot.slane %v31, 7
  %v72 = vsel %vm54, %v70, %v71
  %v73 = vrot.slane %v32, 7
  %v74 = vsel %vm54, %v71, %v73
  %v75 = vrot.slane %v33, 7
  %v76 = vsel %vm54, %v73, %v75
  %v77 = vrot.slane %v34, 7
  %v78 = vsel %vm54, %v75, %v77
  %v79 = vrot.slane %v35, 7
  %v80 = vsel %vm54, %v77, %v79
  %v81 = vrot.slane %v36, 7
  %v82 = vsel %vm54, %v79, %v81
  %v83 = vrot.slane %v37, 7
  %v84 = vsel %vm54, %v81, %v83
  %v101 = vsel %vm54, 0.0, %v55
  %v102 = vsel %vm54, 0.0, %v70
  %vm103 = vcmask 1046528
  %v104 = vrot.slane %v22, 1
  %v105 = vrot.slane %v23, 1
  %v106 = vsel %vm103, %v104, %v105
  %v107 = vrot.slane %v24, 1
  %v108 = vsel %vm103, %v105, %v107
  %v109 = vrot.slane %v25, 1
  %v110 = vsel %vm103, %v107, %v109
  %v111 = vrot.slane %v26, 1
  %v112 = vsel %vm103, %v109, %v111
  %v113 = vrot.slane %v27, 1
  %v114 = vsel %vm103, %v111, %v113
  %v115 = vrot.slane %v28, 1
  %v116 = vsel %vm103, %v113, %v115
  %v117 = vrot.slane %v29, 1
  %v118 = vsel %vm103, %v115, %v117
  %v119 = vrot.slane %v30, 1
  %v120 = vrot.slane %v31, 1
  %v121 = vsel %vm103, %v119, %v120
  %v122 = vrot.slane %v32, 1
  %v123 = vsel %vm103, %v120, %v122
  %v124 = vrot.slane %v33, 1
  %v125 = vsel %vm103, %v122, %v124
  %v126 = vrot.slane %v34, 1
  %v127 = vsel %vm103, %v124, %v126
  %v128 = vrot.slane %v35, 1
  %v129 = vsel %vm103, %v126, %v128
  %v130 = vrot.slane %v36, 1
  %v131 = vsel %vm103, %v128, %v130
  %v132 = vrot.slane %v37, 1
  %v133 = vsel %vm103, %v130, %v132
  %v136 = vsel %vm103, %v117, 0.0
  %v137 = vsel %vm103, %v132, 0.0
  %138 = vrot.lane.b32.xlu0 %v22, 8
  %v139 = vpop.permute.xlu0 %138
  %140 = vrot.lane.b32.xlu0 %v23, 8
  %v141 = vpop.permute.xlu0 %140
  %142 = vrot.lane.b32.xlu0 %v24, 8
  %v143 = vpop.permute.xlu0 %142
  %144 = vrot.lane.b32.xlu0 %v25, 8
  %v145 = vpop.permute.xlu0 %144
  %146 = vrot.lane.b32.xlu0 %v26, 8
  %v147 = vpop.permute.xlu0 %146
  %148 = vrot.lane.b32.xlu0 %v27, 8
  %v149 = vpop.permute.xlu0 %148
  %150 = vrot.lane.b32.xlu0 %v28, 8
  %v151 = vpop.permute.xlu0 %150
  %152 = vrot.lane.b32.xlu0 %v29, 8
  %v153 = vpop.permute.xlu0 %152
  %154 = vrot.lane.b32.xlu0 %v30, 8
  %v155 = vpop.permute.xlu0 %154
  %156 = vrot.lane.b32.xlu0 %v31, 8
  %v157 = vpop.permute.xlu0 %156
  %158 = vrot.lane.b32.xlu0 %v32, 8
  %v159 = vpop.permute.xlu0 %158
  %160 = vrot.lane.b32.xlu0 %v33, 8
  %v161 = vpop.permute.xlu0 %160
  %162 = vrot.lane.b32.xlu0 %v34, 8
  %v163 = vpop.permute.xlu0 %162
  %164 = vrot.lane.b32.xlu0 %v35, 8
  %v165 = vpop.permute.xlu0 %164
  %166 = vrot.lane.b32.xlu0 %v36, 8
  %v167 = vpop.permute.xlu0 %166
  %168 = vrot.lane.b32.xlu0 %v37, 8
  %v169 = vpop.permute.xlu0 %168
  %188 = vrot.lane.b32.xlu0 %v106, 16
  %v189 = vpop.permute.xlu0 %188
  %190 = vrot.lane.b32.xlu0 %v108, 16
  %v191 = vpop.permute.xlu0 %190
  %192 = vrot.lane.b32.xlu0 %v110, 16
  %v193 = vpop.permute.xlu0 %192
  %194 = vrot.lane.b32.xlu0 %v112, 16
  %v195 = vpop.permute.xlu0 %194
  %196 = vrot.lane.b32.xlu0 %v114, 16
  %v197 = vpop.permute.xlu0 %196
  %198 = vrot.lane.b32.xlu0 %v116, 16
  %v199 = vpop.permute.xlu0 %198
  %200 = vrot.lane.b32.xlu0 %v118, 16
  %v201 = vpop.permute.xlu0 %200
  %202 = vrot.lane.b32.xlu0 %v136, 16
  %v203 = vpop.permute.xlu0 %202
  %204 = vrot.lane.b32.xlu0 %v121, 16
  %v205 = vpop.permute.xlu0 %204
  %206 = vrot.lane.b32.xlu0 %v123, 16
  %v207 = vpop.permute.xlu0 %206
  %208 = vrot.lane.b32.xlu0 %v125, 16
  %v209 = vpop.permute.xlu0 %208
  %210 = vrot.lane.b32.xlu0 %v127, 16
  %v211 = vpop.permute.xlu0 %210
  %212 = vrot.lane.b32.xlu0 %v129, 16
  %v213 = vpop.permute.xlu0 %212
  %214 = vrot.lane.b32.xlu0 %v131, 16
  %v215 = vpop.permute.xlu0 %214
  %216 = vrot.lane.b32.xlu0 %v133, 16
  %v217 = vpop.permute.xlu0 %216
  %218 = vrot.lane.b32.xlu0 %v137, 16
  %v219 = vpop.permute.xlu0 %218
  %vm236 = vcmask 64512
  %v237 = vsel %vm236, %v101, %v139
  %v238 = vsel %vm236, %v57, %v141
  %v239 = vsel %vm236, %v59, %v143
  %v240 = vsel %vm236, %v61, %v145
  %v241 = vsel %vm236, %v63, %v147
  %v242 = vsel %vm236, %v65, %v149
  %v243 = vsel %vm236, %v67, %v151
  %v244 = vsel %vm236, %v69, %v153
  %v245 = vsel %vm236, %v102, %v155
  %v246 = vsel %vm236, %v72, %v157
  %v247 = vsel %vm236, %v74, %v159
  %v248 = vsel %vm236, %v76, %v161
  %v249 = vsel %vm236, %v78, %v163
  %v250 = vsel %vm236, %v80, %v165
  %v251 = vsel %vm236, %v82, %v167
  %v252 = vsel %vm236, %v84, %v169
  %vm253 = vcmask 130048
  %v254 = vsel %vm253, %v237, %v189
  %v255 = vsel %vm253, %v238, %v191
  %v256 = vsel %vm253, %v239, %v193
  %v257 = vsel %vm253, %v240, %v195
  %v258 = vsel %vm253, %v241, %v197
  %v259 = vsel %vm253, %v242, %v199
  %v260 = vsel %vm253, %v243, %v201
  %v261 = vsel %vm253, %v244, %v203
  %v262 = vsel %vm253, %v245, %v205
  %v263 = vsel %vm253, %v246, %v207
  %v264 = vsel %vm253, %v247, %v209
  %v265 = vsel %vm253, %v248, %v211
  %v266 = vsel %vm253, %v249, %v213
  %v267 = vsel %vm253, %v250, %v215
  %v268 = vsel %vm253, %v251, %v217
  %v269 = vsel %vm253, %v252, %v219
  %v270 = vpack.c.bf16 %v255, %v254
  %v271 = vpack.c.bf16 %v257, %v256
  %v272 = vpack.c.bf16 %v259, %v258
  %v273 = vpack.c.bf16 %v261, %v260
  %v274 = vpack.c.bf16 %v263, %v262
  %v275 = vpack.c.bf16 %v265, %v264
  %v276 = vpack.c.bf16 %v267, %v266
  %v277 = vpack.c.bf16 %v269, %v268
  %v278 = vld [vmem:[%s1] sm:$0xf]
  %v279 = vld [vmem:[%s1 + $0x4] sm:$0xf]
  %v280 = vld [vmem:[%s1 + $0x8] sm:$0xf]
  %v281 = vlaneseq
  %v282 = vshrl.u32 %v281, 7
  %v283 = vsub.s32 0, %v282
  %v284 = vrot.slane %v21, %v283
  %v288 = vunpack.c.l.b16 %v278
  %v289 = vunpack.c.l.b16 %v279
  %v290 = vunpack.c.l.b16 %v280
  %v291 = vpack.c.b16 %v289, %v288
  %v292 = vpack.c.b16 %v290, %v290
  %vm294 = vcmask 195584
  %v296 = vsel %vm294, %v270, 0
  %v299 = vsel %vm294, %v271, 0
  %v302 = vsel %vm294, %v272, 0
  %v305 = vsel %vm294, %v273, 0
  %v308 = vsel %vm294, %v274, 0
  %v311 = vsel %vm294, %v275, 0
  %v314 = vsel %vm294, %v276, 0
  %v317 = vsel %vm294, %v277, 0
  %vm319 = vcmask 1043456
  %v321 = vsel %vm319, %v292, 0
  %323 = vmatprep.subr.bf16.mxu0 0
  %324 = vmatpush1.bf16.msra.mxu0 %v291
  %325 = vmatprep.subr.bf16.mxu0 0
  %326 = vmatpush1.bf16.msra.mxu0 %v321
  %327 = vmatprep.subr.bf16.mxu0 0
  %328 = vmatpush1.bf16.msra.mxu0 0
  %329 = vmatprep.subr.bf16.mxu0 0
  %330 = vmatpush1.bf16.msra.mxu0 0
  %331 = vmatprep.subr.bf16.mxu0 0
  %332 = vmatpush1.bf16.msra.mxu0 0
  %333 = vmatprep.subr.bf16.mxu0 0
  %334 = vmatpush1.bf16.msra.mxu0 0
  %335 = vmatprep.subr.bf16.mxu0 0
  %336 = vmatpush1.bf16.msra.mxu0 0
  %337 = vmatprep.subr.bf16.mxu0 0
  %338 = vmatpush1.bf16.msra.mxu0 0
  %339 = vmatprep.subr.bf16.mxu0 0
  %340 = vmatpush1.bf16.msra.mxu0 0
  %341 = vmatprep.subr.bf16.mxu0 0
  %342 = vmatpush1.bf16.msra.mxu0 0
  %343 = vmatprep.subr.bf16.mxu0 0
  %344 = vmatpush1.bf16.msra.mxu0 0
  %345 = vmatprep.subr.bf16.mxu0 0
  %346 = vmatpush1.bf16.msra.mxu0 0
  %347 = vmatprep.subr.bf16.mxu0 0
  %348 = vmatpush1.bf16.msra.mxu0 0
  %349 = vmatprep.subr.bf16.mxu0 0
  %350 = vmatpush1.bf16.msra.mxu0 0
  %351 = vmatprep.subr.bf16.mxu0 0
  %352 = vmatpush1.bf16.msra.mxu0 0
  %353 = vmatprep.subr.bf16.mxu0 0
  %354 = vmatpush1.bf16.msra.mxu0 0
  %355 = vmatprep.mubr.bf16.mxu0 0
  %356 = vmatmul.mubr.bf16.gmra.mrb[0].mxu0 %v296
  %v357 = vpop.f32.mrb[0].mxu0
  %v358 = vadd.f32 %v284, %v357
  %v359 = vpop.f32.mrb[0].mxu0
  %v360 = vpop.f32.mrb[0].mxu0
  %v361 = vadd.f32 %v284, %v360
  %v362 = vpop.f32.mrb[0].mxu0
  %363 = vmatprep.mubr.bf16.mxu0 0
  %364 = vmatmul.mubr.bf16.gmra.mrb[0].mxu0 %v299
  %v365 = vpop.f32.mrb[0].mxu0
  %v366 = vadd.f32 %v284, %v365
  %v367 = vpop.f32.mrb[0].mxu0
  %v368 = vpop.f32.mrb[0].mxu0
  %v369 = vadd.f32 %v284, %v368
  %v370 = vpop.f32.mrb[0].mxu0
  %371 = vmatprep.mubr.bf16.mxu0 0
  %372 = vmatmul.mubr.bf16.gmra.mrb[0].mxu0 %v302
  %v373 = vpop.f32.mrb[0].mxu0
  %v374 = vadd.f32 %v284, %v373
  %v375 = vpop.f32.mrb[0].mxu0
  %v376 = vpop.f32.mrb[0].mxu0
  %v377 = vadd.f32 %v284, %v376
  %v378 = vpop.f32.mrb[0].mxu0
  %379 = vmatprep.mubr.bf16.mxu0 0
  %380 = vmatmul.mubr.bf16.gmra.mrb[0].mxu0 %v305
  %v381 = vpop.f32.mrb[0].mxu0
  %v382 = vadd.f32 %v284, %v381
  %v383 = vpop.f32.mrb[0].mxu0
  %v384 = vpop.f32.mrb[0].mxu0
  %v385 = vadd.f32 %v284, %v384
  %v386 = vpop.f32.mrb[0].mxu0
  %387 = vmatprep.mubr.bf16.mxu0 0
  %388 = vmatmul.mubr.bf16.gmra.mrb[0].mxu0 %v308
  %v389 = vpop.f32.mrb[0].mxu0
  %v390 = vadd.f32 %v284, %v389
  %v391 = vpop.f32.mrb[0].mxu0
  %v392 = vpop.f32.mrb[0].mxu0
  %v393 = vadd.f32 %v284, %v392
  %v394 = vpop.f32.mrb[0].mxu0
  %395 = vmatprep.mubr.bf16.mxu0 0
  %396 = vmatmul.mubr.bf16.gmra.mrb[0].mxu0 %v311
  %v397 = vpop.f32.mrb[0].mxu0
  %v398 = vadd.f32 %v284, %v397
  %v399 = vpop.f32.mrb[0].mxu0
  %v400 = vpop.f32.mrb[0].mxu0
  %v401 = vadd.f32 %v284, %v400
  %v402 = vpop.f32.mrb[0].mxu0
  %403 = vmatprep.mubr.bf16.mxu0 0
  %404 = vmatmul.mubr.bf16.gmra.mrb[0].mxu0 %v314
  %v405 = vpop.f32.mrb[0].mxu0
  %v406 = vadd.f32 %v284, %v405
  %v407 = vpop.f32.mrb[0].mxu0
  %v408 = vpop.f32.mrb[0].mxu0
  %v409 = vadd.f32 %v284, %v408
  %v410 = vpop.f32.mrb[0].mxu0
  %411 = vmatprep.mubr.bf16.mxu0 0
  %412 = vmatmul.mubr.bf16.gmra.mrb[0].mxu0 %v317
  %v413 = vpop.f32.mrb[0].mxu0
  %v414 = vadd.f32 %v284, %v413
  %v415 = vpop.f32.mrb[0].mxu0
  %v416 = vpop.f32.mrb[0].mxu0
  %v417 = vadd.f32 %v284, %v416
  %v418 = vpop.f32.mrb[0].mxu0
  %419 = vdwg.mxu0
  %v420 = vmax.f32 %v358, 0.0
  %v421 = vmax.f32 %v361, 0.0
  %v422 = vmax.f32 %v366, 0.0
  %v423 = vmax.f32 %v369, 0.0
  %v424 = vmax.f32 %v374, 0.0
  %v425 = vmax.f32 %v377, 0.0
  %v426 = vmax.f32 %v382, 0.0
  %v427 = vmax.f32 %v385, 0.0
  %v428 = vmax.f32 %v390, 0.0
  %v429 = vmax.f32 %v393, 0.0
  %v430 = vmax.f32 %v398, 0.0
  %v431 = vmax.f32 %v401, 0.0
  %v432 = vmax.f32 %v406, 0.0
  %v433 = vmax.f32 %v409, 0.0
  %v434 = vmax.f32 %v414, 0.0
  %v435 = vmax.f32 %v417, 0.0
  %v436 = vsel %vm253, %v420, 0.0
  %v437 = vsel %vm253, %v421, 0.0
  %v438 = vadd.f32 %v436, %v437
  %v439 = vsel %vm253, %v422, 0.0
  %v440 = vadd.f32 %v438, %v439
  %v441 = vsel %vm253, %v423, 0.0
  %v442 = vadd.f32 %v440, %v441
  %v443 = vsel %vm253, %v424, 0.0
  %v444 = vadd.f32 %v442, %v443
  %v445 = vsel %vm253, %v425, 0.0
  %v446 = vadd.f32 %v444, %v445
  %v447 = vsel %vm253, %v426, 0.0
  %v448 = vadd.f32 %v446, %v447
  %v449 = vsel %vm253, %v427, 0.0
  %v450 = vadd.f32 %v448, %v449
  %v451 = vsel %vm253, %v428, 0.0
  %v452 = vadd.f32 %v450, %v451
  %v453 = vsel %vm253, %v429, 0.0
  %v454 = vadd.f32 %v452, %v453
  %v455 = vsel %vm253, %v430, 0.0
  %v456 = vadd.f32 %v454, %v455
  %v457 = vsel %vm253, %v431, 0.0
  %v458 = vadd.f32 %v456, %v457
  %v459 = vsel %vm253, %v432, 0.0
  %v460 = vadd.f32 %v458, %v459
  %v461 = vsel %vm253, %v433, 0.0
  %v462 = vadd.f32 %v460, %v461
  %v463 = vsel %vm253, %v434, 0.0
  %v464 = vadd.f32 %v462, %v463
  %v465 = vsel %vm253, %v435, 0.0
  %v466 = vadd.f32 %v464, %v465
  %v467 = vrot.slane %v466, 4
  %v468 = vadd.f32 %v466, %v467
  %v469 = vrot.slane %v468, 2
  %v470 = vadd.f32 %v468, %v469
  %v471 = vrot.slane %v470, 1
  %v472 = vadd.f32 %v470, %v471
  %v473 = vmul.f32 %v472, 0.0078125
  %v474 = vmul.f32 %v420, %v420
  %v475 = vmul.f32 %v421, %v421
  %v476 = vmul.f32 %v422, %v422
  %v477 = vmul.f32 %v423, %v423
  %v478 = vmul.f32 %v424, %v424
  %v479 = vmul.f32 %v425, %v425
  %v480 = vmul.f32 %v426, %v426
  %v481 = vmul.f32 %v427, %v427
  %v482 = vmul.f32 %v428, %v428
  %v483 = vmul.f32 %v429, %v429
  %v484 = vmul.f32 %v430, %v430
  %v485 = vmul.f32 %v431, %v431
  %v486 = vmul.f32 %v432, %v432
  %v487 = vmul.f32 %v433, %v433
  %v488 = vmul.f32 %v434, %v434
  %v489 = vmul.f32 %v435, %v435
  %v490 = vsel %vm253, %v474, 0.0
  %v491 = vsel %vm253, %v475, 0.0
  %v492 = vadd.f32 %v490, %v491
  %v493 = vsel %vm253, %v476, 0.0
  %v494 = vadd.f32 %v492, %v493
  %v495 = vsel %vm253, %v477, 0.0
  %v496 = vadd.f32 %v494, %v495
  %v497 = vsel %vm253, %v478, 0.0
  %v498 = vadd.f32 %v496, %v497
  %v499 = vsel %vm253, %v479, 0.0
  %v500 = vadd.f32 %v498, %v499
  %v501 = vsel %vm253, %v480, 0.0
  %v502 = vadd.f32 %v500, %v501
  %v503 = vsel %vm253, %v481, 0.0
  %v504 = vadd.f32 %v502, %v503
  %v505 = vsel %vm253, %v482, 0.0
  %v506 = vadd.f32 %v504, %v505
  %v507 = vsel %vm253, %v483, 0.0
  %v508 = vadd.f32 %v506, %v507
  %v509 = vsel %vm253, %v484, 0.0
  %v510 = vadd.f32 %v508, %v509
  %v511 = vsel %vm253, %v485, 0.0
  %v512 = vadd.f32 %v510, %v511
  %v513 = vsel %vm253, %v486, 0.0
  %v514 = vadd.f32 %v512, %v513
  %v515 = vsel %vm253, %v487, 0.0
  %v516 = vadd.f32 %v514, %v515
  %v517 = vsel %vm253, %v488, 0.0
  %v518 = vadd.f32 %v516, %v517
  %v519 = vsel %vm253, %v489, 0.0
  %v520 = vadd.f32 %v518, %v519
  %v521 = vrot.slane %v520, 4
  %v522 = vadd.f32 %v520, %v521
  %v523 = vrot.slane %v522, 2
  %v524 = vadd.f32 %v522, %v523
  %v525 = vrot.slane %v524, 1
  %v526 = vadd.f32 %v524, %v525
  %v527 = vmul.f32 %v526, 0.0078125
  %v528 = vmul.f32 %v473, %v473
  %v529 = vsub.f32 %v527, %v528
  %v530 = vadd.f32 %v529, 1e-05
  %v531 = vrsqrt.pop %v530
  %v532 = vmul.f32 %v21, %v531
  %v533 = vlaneseq
  %v534 = vshrl.u32 %v533, 7
  %v535 = vsub.s32 1, %v534
  %v536 = vrot.slane %v532, %v535
  %v537 = vmul.f32 %v420, %v536
  %v538 = vmul.f32 %v421, %v536
  %v539 = vmul.f32 %v422, %v536
  %v540 = vmul.f32 %v423, %v536
  %v541 = vmul.f32 %v424, %v536
  %v542 = vmul.f32 %v425, %v536
  %v543 = vmul.f32 %v426, %v536
  %v544 = vmul.f32 %v427, %v536
  %v545 = vmul.f32 %v428, %v536
  %v546 = vmul.f32 %v429, %v536
  %v547 = vmul.f32 %v430, %v536
  %v548 = vmul.f32 %v431, %v536
  %v549 = vmul.f32 %v432, %v536
  %v550 = vmul.f32 %v433, %v536
  %v551 = vmul.f32 %v434, %v536
  %v552 = vmul.f32 %v435, %v536
  %v553 = vmul.f32 %v473, %v532
  %v555 = vrot.slane %v553, 7
  %v557 = vsub.f32 %v21, %v555
  %v558 = vlaneseq
  %v559 = vshrl.u32 %v558, 7
  %v560 = vsub.s32 2, %v559
  %v561 = vrot.slane %v557, %v560
  %v562 = vadd.f32 %v537, %v561
  %v563 = vadd.f32 %v538, %v561
  %v564 = vadd.f32 %v539, %v561
  %v565 = vadd.f32 %v540, %v561
  %v566 = vadd.f32 %v541, %v561
  %v567 = vadd.f32 %v542, %v561
  %v568 = vadd.f32 %v543, %v561
  %v569 = vadd.f32 %v544, %v561
  %v570 = vadd.f32 %v545, %v561
  %v571 = vadd.f32 %v546, %v561
  %v572 = vadd.f32 %v547, %v561
  %v573 = vadd.f32 %v548, %v561
  %v574 = vadd.f32 %v549, %v561
  %v575 = vadd.f32 %v550, %v561
  %v576 = vadd.f32 %v551, %v561
  %v577 = vadd.f32 %v552, %v561
  %v594 = vrot.slane %v562, 7
  %v595 = vrot.slane %v563, 7
  %v596 = vsel %vm54, %v594, %v595
  %v597 = vrot.slane %v564, 7
  %v598 = vsel %vm54, %v595, %v597
  %v599 = vrot.slane %v565, 7
  %v600 = vsel %vm54, %v597, %v599
  %v601 = vrot.slane %v566, 7
  %v602 = vsel %vm54, %v599, %v601
  %v603 = vrot.slane %v567, 7
  %v604 = vsel %vm54, %v601, %v603
  %v605 = vrot.slane %v568, 7
  %v606 = vsel %vm54, %v603, %v605
  %v607 = vrot.slane %v569, 7
  %v608 = vsel %vm54, %v605, %v607
  %v609 = vrot.slane %v570, 7
  %v610 = vrot.slane %v571, 7
  %v611 = vsel %vm54, %v609, %v610
  %v612 = vrot.slane %v572, 7
  %v613 = vsel %vm54, %v610, %v612
  %v614 = vrot.slane %v573, 7
  %v615 = vsel %vm54, %v612, %v614
  %v616 = vrot.slane %v574, 7
  %v617 = vsel %vm54, %v614, %v616
  %v618 = vrot.slane %v575, 7
  %v619 = vsel %vm54, %v616, %v618
  %v620 = vrot.slane %v576, 7
  %v621 = vsel %vm54, %v618, %v620
  %v622 = vrot.slane %v577, 7
  %v623 = vsel %vm54, %v620, %v622
  %v640 = vsel %vm54, 0.0, %v594
  %v641 = vsel %vm54, 0.0, %v609
  %v642 = vrot.slane %v562, 1
  %v643 = vrot.slane %v563, 1
  %v644 = vsel %vm103, %v642, %v643
  %v645 = vrot.slane %v564, 1
  %v646 = vsel %vm103, %v643, %v645
  %v647 = vrot.slane %v565, 1
  %v648 = vsel %vm103, %v645, %v647
  %v649 = vrot.slane %v566, 1
  %v650 = vsel %vm103, %v647, %v649
  %v651 = vrot.slane %v567, 1
  %v652 = vsel %vm103, %v649, %v651
  %v653 = vrot.slane %v568, 1
  %v654 = vsel %vm103, %v651, %v653
  %v655 = vrot.slane %v569, 1
  %v656 = vsel %vm103, %v653, %v655
  %v657 = vrot.slane %v570, 1
  %v658 = vrot.slane %v571, 1
  %v659 = vsel %vm103, %v657, %v658
  %v660 = vrot.slane %v572, 1
  %v661 = vsel %vm103, %v658, %v660
  %v662 = vrot.slane %v573, 1
  %v663 = vsel %vm103, %v660, %v662
  %v664 = vrot.slane %v574, 1
  %v665 = vsel %vm103, %v662, %v664
  %v666 = vrot.slane %v575, 1
  %v667 = vsel %vm103, %v664, %v666
  %v668 = vrot.slane %v576, 1
  %v669 = vsel %vm103, %v666, %v668
  %v670 = vrot.slane %v577, 1
  %v671 = vsel %vm103, %v668, %v670
  %v674 = vsel %vm103, %v655, 0.0
  %v675 = vsel %vm103, %v670, 0.0
  %676 = vrot.lane.b32.xlu0 %v562, 16
  %v677 = vpop.permute.xlu0 %676
  %678 = vrot.lane.b32.xlu0 %v563, 16
  %v679 = vpop.permute.xlu0 %678
  %680 = vrot.lane.b32.xlu0 %v564, 16
  %v681 = vpop.permute.xlu0 %680
  %682 = vrot.lane.b32.xlu0 %v565, 16
  %v683 = vpop.permute.xlu0 %682
  %684 = vrot.lane.b32.xlu0 %v566, 16
  %v685 = vpop.permute.xlu0 %684
  %686 = vrot.lane.b32.xlu0 %v567, 16
  %v687 = vpop.permute.xlu0 %686
  %688 = vrot.lane.b32.xlu0 %v568, 16
  %v689 = vpop.permute.xlu0 %688
  %690 = vrot.lane.b32.xlu0 %v569, 16
  %v691 = vpop.permute.xlu0 %690
  %692 = vrot.lane.b32.xlu0 %v570, 16
  %v693 = vpop.permute.xlu0 %692
  %694 = vrot.lane.b32.xlu0 %v571, 16
  %v695 = vpop.permute.xlu0 %694
  %696 = vrot.lane.b32.xlu0 %v572, 16
  %v697 = vpop.permute.xlu0 %696
  %698 = vrot.lane.b32.xlu0 %v573, 16
  %v699 = vpop.permute.xlu0 %698
  %700 = vrot.lane.b32.xlu0 %v574, 16
  %v701 = vpop.permute.xlu0 %700
  %702 = vrot.lane.b32.xlu0 %v575, 16
  %v703 = vpop.permute.xlu0 %702
  %704 = vrot.lane.b32.xlu0 %v576, 16
  %v705 = vpop.permute.xlu0 %704
  %706 = vrot.lane.b32.xlu0 %v577, 16
  %v707 = vpop.permute.xlu0 %706
  %726 = vrot.lane.b32.xlu0 %v644, 32
  %v727 = vpop.permute.xlu0 %726
  %728 = vrot.lane.b32.xlu0 %v646, 32
  %v729 = vpop.permute.xlu0 %728
  %730 = vrot.lane.b32.xlu0 %v648, 32
  %v731 = vpop.permute.xlu0 %730
  %732 = vrot.lane.b32.xlu0 %v650, 32
  %v733 = vpop.permute.xlu0 %732
  %734 = vrot.lane.b32.xlu0 %v652, 32
  %v735 = vpop.permute.xlu0 %734
  %736 = vrot.lane.b32.xlu0 %v654, 32
  %v737 = vpop.permute.xlu0 %736
  %738 = vrot.lane.b32.xlu0 %v656, 32
  %v739 = vpop.permute.xlu0 %738
  %740 = vrot.lane.b32.xlu0 %v674, 32
  %v741 = vpop.permute.xlu0 %740
  %742 = vrot.lane.b32.xlu0 %v659, 32
  %v743 = vpop.permute.xlu0 %742
  %744 = vrot.lane.b32.xlu0 %v661, 32
  %v745 = vpop.permute.xlu0 %744
  %746 = vrot.lane.b32.xlu0 %v663, 32
  %v747 = vpop.permute.xlu0 %746
  %748 = vrot.lane.b32.xlu0 %v665, 32
  %v749 = vpop.permute.xlu0 %748
  %750 = vrot.lane.b32.xlu0 %v667, 32
  %v751 = vpop.permute.xlu0 %750
  %752 = vrot.lane.b32.xlu0 %v669, 32
  %v753 = vpop.permute.xlu0 %752
  %754 = vrot.lane.b32.xlu0 %v671, 32
  %v755 = vpop.permute.xlu0 %754
  %756 = vrot.lane.b32.xlu0 %v675, 32
  %v757 = vpop.permute.xlu0 %756
  %v774 = vsel %vm253, %v640, %v677
  %v775 = vsel %vm253, %v596, %v679
  %v776 = vsel %vm253, %v598, %v681
  %v777 = vsel %vm253, %v600, %v683
  %v778 = vsel %vm253, %v602, %v685
  %v779 = vsel %vm253, %v604, %v687
  %v780 = vsel %vm253, %v606, %v689
  %v781 = vsel %vm253, %v608, %v691
  %v782 = vsel %vm253, %v641, %v693
  %v783 = vsel %vm253, %v611, %v695
  %v784 = vsel %vm253, %v613, %v697
  %v785 = vsel %vm253, %v615, %v699
  %v786 = vsel %vm253, %v617, %v701
  %v787 = vsel %vm253, %v619, %v703
  %v788 = vsel %vm253, %v621, %v705
  %v789 = vsel %vm253, %v623, %v707
  %vm790 = vcmask 261120
  %v791 = vsel %vm790, %v774, %v727
  %v792 = vsel %vm790, %v775, %v729
  %v793 = vsel %vm790, %v776, %v731
  %v794 = vsel %vm790, %v777, %v733
  %v795 = vsel %vm790, %v778, %v735
  %v796 = vsel %vm790, %v779, %v737
  %v797 = vsel %vm790, %v780, %v739
  %v798 = vsel %vm790, %v781, %v741
  %v799 = vsel %vm790, %v782, %v743
  %v800 = vsel %vm790, %v783, %v745
  %v801 = vsel %vm790, %v784, %v747
  %v802 = vsel %vm790, %v785, %v749
  %v803 = vsel %vm790, %v786, %v751
  %v804 = vsel %vm790, %v787, %v753
  %v805 = vsel %vm790, %v788, %v755
  %v806 = vsel %vm790, %v789, %v757
  %v807 = vpack.c.bf16 %v792, %v791
  %v808 = vpack.c.bf16 %v794, %v793
  %v809 = vpack.c.bf16 %v796, %v795
  %v810 = vpack.c.bf16 %v798, %v797
  %v811 = vpack.c.bf16 %v800, %v799
  %v812 = vpack.c.bf16 %v802, %v801
  %v813 = vpack.c.bf16 %v804, %v803
  %v814 = vpack.c.bf16 %v806, %v805
  %v815 = vld [vmem:[%s2] sm:$0xf]
  %v816 = vld [vmem:[%s2 + $0x4] sm:$0xf]
  %v817 = vld [vmem:[%s2 + $0x8] sm:$0xf]
  %v818 = vld [vmem:[%s2 + $0xc] sm:$0xf]
  %v819 = vld [vmem:[%s2 + $0x10] sm:$0xf]
  %v820 = vld [vmem:[%s2 + $0x14] sm:$0xf]
  %v821 = vlaneseq
  %v822 = vshrl.u32 %v821, 7
  %v823 = vsub.s32 3, %v822
  %v824 = vrot.slane %v21, %v823
  %v831 = vunpack.c.l.b16 %v815
  %v832 = vunpack.c.l.b16 %v816
  %v833 = vunpack.c.l.b16 %v817
  %v834 = vunpack.c.l.b16 %v818
  %v835 = vunpack.c.l.b16 %v819
  %v836 = vunpack.c.l.b16 %v820
  %v837 = vpack.c.b16 %v832, %v831
  %v838 = vpack.c.b16 %v834, %v833
  %v839 = vpack.c.b16 %v836, %v835
  %vm843 = vcmask 392192
  %v845 = vsel %vm843, %v807, 0
  %v848 = vsel %vm843, %v808, 0
  %v851 = vsel %vm843, %v809, 0
  %v854 = vsel %vm843, %v810, 0
  %v857 = vsel %vm843, %v811, 0
  %v860 = vsel %vm843, %v812, 0
  %v863 = vsel %vm843, %v813, 0
  %v866 = vsel %vm843, %v814, 0
  %868 = vmatprep.subr.bf16.mxu0 0
  %869 = vmatpush1.bf16.msra.mxu0 %v837
  %870 = vmatprep.subr.bf16.mxu0 0
  %871 = vmatpush1.bf16.msra.mxu0 %v838
  %872 = vmatprep.subr.bf16.mxu0 0
  %873 = vmatpush1.bf16.msra.mxu0 %v839
  %874 = vmatprep.subr.bf16.mxu0 0
  %875 = vmatpush1.bf16.msra.mxu0 0
  %876 = vmatprep.subr.bf16.mxu0 0
  %877 = vmatpush1.bf16.msra.mxu0 0
  %878 = vmatprep.subr.bf16.mxu0 0
  %879 = vmatpush1.bf16.msra.mxu0 0
  %880 = vmatprep.subr.bf16.mxu0 0
  %881 = vmatpush1.bf16.msra.mxu0 0
  %882 = vmatprep.subr.bf16.mxu0 0
  %883 = vmatpush1.bf16.msra.mxu0 0
  %884 = vmatprep.subr.bf16.mxu0 0
  %885 = vmatpush1.bf16.msra.mxu0 0
  %886 = vmatprep.subr.bf16.mxu0 0
  %887 = vmatpush1.bf16.msra.mxu0 0
  %888 = vmatprep.subr.bf16.mxu0 0
  %889 = vmatpush1.bf16.msra.mxu0 0
  %890 = vmatprep.subr.bf16.mxu0 0
  %891 = vmatpush1.bf16.msra.mxu0 0
  %892 = vmatprep.subr.bf16.mxu0 0
  %893 = vmatpush1.bf16.msra.mxu0 0
  %894 = vmatprep.subr.bf16.mxu0 0
  %895 = vmatpush1.bf16.msra.mxu0 0
  %896 = vmatprep.subr.bf16.mxu0 0
  %897 = vmatpush1.bf16.msra.mxu0 0
  %898 = vmatprep.subr.bf16.mxu0 0
  %899 = vmatpush1.bf16.msra.mxu0 0
  %900 = vmatprep.mubr.bf16.mxu0 0
  %901 = vmatmul.mubr.bf16.gmra.mrb[0].mxu0 %v845
  %v902 = vpop.f32.mrb[0].mxu0
  %v903 = vadd.f32 %v824, %v902
  %v904 = vpop.f32.mrb[0].mxu0
  %v905 = vpop.f32.mrb[0].mxu0
  %v906 = vadd.f32 %v824, %v905
  %v907 = vpop.f32.mrb[0].mxu0
  %908 = vmatprep.mubr.bf16.mxu0 0
  %909 = vmatmul.mubr.bf16.gmra.mrb[0].mxu0 %v848
  %v910 = vpop.f32.mrb[0].mxu0
  %v911 = vadd.f32 %v824, %v910
  %v912 = vpop.f32.mrb[0].mxu0
  %v913 = vpop.f32.mrb[0].mxu0
  %v914 = vadd.f32 %v824, %v913
  %v915 = vpop.f32.mrb[0].mxu0
  %916 = vmatprep.mubr.bf16.mxu0 0
  %917 = vmatmul.mubr.bf16.gmra.mrb[0].mxu0 %v851
  %v918 = vpop.f32.mrb[0].mxu0
  %v919 = vadd.f32 %v824, %v918
  %v920 = vpop.f32.mrb[0].mxu0
  %v921 = vpop.f32.mrb[0].mxu0
  %v922 = vadd.f32 %v824, %v921
  %v923 = vpop.f32.mrb[0].mxu0
  %924 = vmatprep.mubr.bf16.mxu0 0
  %925 = vmatmul.mubr.bf16.gmra.mrb[0].mxu0 %v854
  %v926 = vpop.f32.mrb[0].mxu0
  %v927 = vadd.f32 %v824, %v926
  %v928 = vpop.f32.mrb[0].mxu0
  %v929 = vpop.f32.mrb[0].mxu0
  %v930 = vadd.f32 %v824, %v929
  %v931 = vpop.f32.mrb[0].mxu0
  %932 = vmatprep.mubr.bf16.mxu0 0
  %933 = vmatmul.mubr.bf16.gmra.mrb[0].mxu0 %v857
  %v934 = vpop.f32.mrb[0].mxu0
  %v935 = vadd.f32 %v824, %v934
  %v936 = vpop.f32.mrb[0].mxu0
  %v937 = vpop.f32.mrb[0].mxu0
  %v938 = vadd.f32 %v824, %v937
  %v939 = vpop.f32.mrb[0].mxu0
  %940 = vmatprep.mubr.bf16.mxu0 0
  %941 = vmatmul.mubr.bf16.gmra.mrb[0].mxu0 %v860
  %v942 = vpop.f32.mrb[0].mxu0
  %v943 = vadd.f32 %v824, %v942
  %v944 = vpop.f32.mrb[0].mxu0
  %v945 = vpop.f32.mrb[0].mxu0
  %v946 = vadd.f32 %v824, %v945
  %v947 = vpop.f32.mrb[0].mxu0
  %948 = vmatprep.mubr.bf16.mxu0 0
  %949 = vmatmul.mubr.bf16.gmra.mrb[0].mxu0 %v863
  %v950 = vpop.f32.mrb[0].mxu0
  %v951 = vadd.f32 %v824, %v950
  %v952 = vpop.f32.mrb[0].mxu0
  %v953 = vpop.f32.mrb[0].mxu0
  %v954 = vadd.f32 %v824, %v953
  %v955 = vpop.f32.mrb[0].mxu0
  %956 = vmatprep.mubr.bf16.mxu0 0
  %957 = vmatmul.mubr.bf16.gmra.mrb[0].mxu0 %v866
  %v958 = vpop.f32.mrb[0].mxu0
  %v959 = vadd.f32 %v824, %v958
  %v960 = vpop.f32.mrb[0].mxu0
  %v961 = vpop.f32.mrb[0].mxu0
  %v962 = vadd.f32 %v824, %v961
  %v963 = vpop.f32.mrb[0].mxu0
  %964 = vdwg.mxu0
  %v965 = vmax.f32 %v903, 0.0
  %v966 = vmax.f32 %v906, 0.0
  %v967 = vmax.f32 %v911, 0.0
  %v968 = vmax.f32 %v914, 0.0
  %v969 = vmax.f32 %v919, 0.0
  %v970 = vmax.f32 %v922, 0.0
  %v971 = vmax.f32 %v927, 0.0
  %v972 = vmax.f32 %v930, 0.0
  %v973 = vmax.f32 %v935, 0.0
  %v974 = vmax.f32 %v938, 0.0
  %v975 = vmax.f32 %v943, 0.0
  %v976 = vmax.f32 %v946, 0.0
  %v977 = vmax.f32 %v951, 0.0
  %v978 = vmax.f32 %v954, 0.0
  %v979 = vmax.f32 %v959, 0.0
  %v980 = vmax.f32 %v962, 0.0
  %v981 = vsel %vm253, %v965, 0.0
  %v982 = vsel %vm253, %v966, 0.0
  %v983 = vadd.f32 %v981, %v982
  %v984 = vsel %vm253, %v967, 0.0
  %v985 = vadd.f32 %v983, %v984
  %v986 = vsel %vm253, %v968, 0.0
  %v987 = vadd.f32 %v985, %v986
  %v988 = vsel %vm253, %v969, 0.0
  %v989 = vadd.f32 %v987, %v988
  %v990 = vsel %vm253, %v970, 0.0
  %v991 = vadd.f32 %v989, %v990
  %v992 = vsel %vm253, %v971, 0.0
  %v993 = vadd.f32 %v991, %v992
  %v994 = vsel %vm253, %v972, 0.0
  %v995 = vadd.f32 %v993, %v994
  %v996 = vsel %vm253, %v973, 0.0
  %v997 = vadd.f32 %v995, %v996
  %v998 = vsel %vm253, %v974, 0.0
  %v999 = vadd.f32 %v997, %v998
  %v1000 = vsel %vm253, %v975, 0.0
  %v1001 = vadd.f32 %v999, %v1000
  %v1002 = vsel %vm253, %v976, 0.0
  %v1003 = vadd.f32 %v1001, %v1002
  %v1004 = vsel %vm253, %v977, 0.0
  %v1005 = vadd.f32 %v1003, %v1004
  %v1006 = vsel %vm253, %v978, 0.0
  %v1007 = vadd.f32 %v1005, %v1006
  %v1008 = vsel %vm253, %v979, 0.0
  %v1009 = vadd.f32 %v1007, %v1008
  %v1010 = vsel %vm253, %v980, 0.0
  %v1011 = vadd.f32 %v1009, %v1010
  %v1012 = vrot.slane %v1011, 4
  %v1013 = vadd.f32 %v1011, %v1012
  %v1014 = vrot.slane %v1013, 2
  %v1015 = vadd.f32 %v1013, %v1014
  %v1016 = vrot.slane %v1015, 1
  %v1017 = vadd.f32 %v1015, %v1016
  %v1018 = vmul.f32 %v1017, 0.0078125
  %v1019 = vmul.f32 %v965, %v965
  %v1020 = vmul.f32 %v966, %v966
  %v1021 = vmul.f32 %v967, %v967
  %v1022 = vmul.f32 %v968, %v968
  %v1023 = vmul.f32 %v969, %v969
  %v1024 = vmul.f32 %v970, %v970
  %v1025 = vmul.f32 %v971, %v971
  %v1026 = vmul.f32 %v972, %v972
  %v1027 = vmul.f32 %v973, %v973
  %v1028 = vmul.f32 %v974, %v974
  %v1029 = vmul.f32 %v975, %v975
  %v1030 = vmul.f32 %v976, %v976
  %v1031 = vmul.f32 %v977, %v977
  %v1032 = vmul.f32 %v978, %v978
  %v1033 = vmul.f32 %v979, %v979
  %v1034 = vmul.f32 %v980, %v980
  %v1035 = vsel %vm253, %v1019, 0.0
  %v1036 = vsel %vm253, %v1020, 0.0
  %v1037 = vadd.f32 %v1035, %v1036
  %v1038 = vsel %vm253, %v1021, 0.0
  %v1039 = vadd.f32 %v1037, %v1038
  %v1040 = vsel %vm253, %v1022, 0.0
  %v1041 = vadd.f32 %v1039, %v1040
  %v1042 = vsel %vm253, %v1023, 0.0
  %v1043 = vadd.f32 %v1041, %v1042
  %v1044 = vsel %vm253, %v1024, 0.0
  %v1045 = vadd.f32 %v1043, %v1044
  %v1046 = vsel %vm253, %v1025, 0.0
  %v1047 = vadd.f32 %v1045, %v1046
  %v1048 = vsel %vm253, %v1026, 0.0
  %v1049 = vadd.f32 %v1047, %v1048
  %v1050 = vsel %vm253, %v1027, 0.0
  %v1051 = vadd.f32 %v1049, %v1050
  %v1052 = vsel %vm253, %v1028, 0.0
  %v1053 = vadd.f32 %v1051, %v1052
  %v1054 = vsel %vm253, %v1029, 0.0
  %v1055 = vadd.f32 %v1053, %v1054
  %v1056 = vsel %vm253, %v1030, 0.0
  %v1057 = vadd.f32 %v1055, %v1056
  %v1058 = vsel %vm253, %v1031, 0.0
  %v1059 = vadd.f32 %v1057, %v1058
  %v1060 = vsel %vm253, %v1032, 0.0
  %v1061 = vadd.f32 %v1059, %v1060
  %v1062 = vsel %vm253, %v1033, 0.0
  %v1063 = vadd.f32 %v1061, %v1062
  %v1064 = vsel %vm253, %v1034, 0.0
  %v1065 = vadd.f32 %v1063, %v1064
  %v1066 = vrot.slane %v1065, 4
  %v1067 = vadd.f32 %v1065, %v1066
  %v1068 = vrot.slane %v1067, 2
  %v1069 = vadd.f32 %v1067, %v1068
  %v1070 = vrot.slane %v1069, 1
  %v1071 = vadd.f32 %v1069, %v1070
  %v1072 = vmul.f32 %v1071, 0.0078125
  %v1073 = vmul.f32 %v1018, %v1018
  %v1074 = vsub.f32 %v1072, %v1073
  %v1075 = vadd.f32 %v1074, 1e-05
  %v1076 = vrsqrt.pop %v1075
  %v1077 = vmul.f32 %v21, %v1076
  %v1078 = vlaneseq
  %v1079 = vshrl.u32 %v1078, 7
  %v1080 = vsub.s32 4, %v1079
  %v1081 = vrot.slane %v1077, %v1080
  %v1082 = vmul.f32 %v965, %v1081
  %v1083 = vmul.f32 %v966, %v1081
  %v1084 = vmul.f32 %v967, %v1081
  %v1085 = vmul.f32 %v968, %v1081
  %v1086 = vmul.f32 %v969, %v1081
  %v1087 = vmul.f32 %v970, %v1081
  %v1088 = vmul.f32 %v971, %v1081
  %v1089 = vmul.f32 %v972, %v1081
  %v1090 = vmul.f32 %v973, %v1081
  %v1091 = vmul.f32 %v974, %v1081
  %v1092 = vmul.f32 %v975, %v1081
  %v1093 = vmul.f32 %v976, %v1081
  %v1094 = vmul.f32 %v977, %v1081
  %v1095 = vmul.f32 %v978, %v1081
  %v1096 = vmul.f32 %v979, %v1081
  %v1097 = vmul.f32 %v980, %v1081
  %v1098 = vmul.f32 %v1018, %v1077
  %v1100 = vrot.slane %v1098, 7
  %v1102 = vsub.f32 %v21, %v1100
  %v1103 = vlaneseq
  %v1104 = vshrl.u32 %v1103, 7
  %v1105 = vsub.s32 5, %v1104
  %v1106 = vrot.slane %v1102, %v1105
  %v1107 = vadd.f32 %v1082, %v1106
  %v1108 = vadd.f32 %v1083, %v1106
  %v1109 = vadd.f32 %v1084, %v1106
  %v1110 = vadd.f32 %v1085, %v1106
  %v1111 = vadd.f32 %v1086, %v1106
  %v1112 = vadd.f32 %v1087, %v1106
  %v1113 = vadd.f32 %v1088, %v1106
  %v1114 = vadd.f32 %v1089, %v1106
  %v1115 = vadd.f32 %v1090, %v1106
  %v1116 = vadd.f32 %v1091, %v1106
  %v1117 = vadd.f32 %v1092, %v1106
  %v1118 = vadd.f32 %v1093, %v1106
  %v1119 = vadd.f32 %v1094, %v1106
  %v1120 = vadd.f32 %v1095, %v1106
  %v1121 = vadd.f32 %v1096, %v1106
  %v1122 = vadd.f32 %v1097, %v1106
  %1123 = vst.msk [vmem:[#allocation2] sm:$0xff] %vm253, %v1107
  %1124 = vst.msk [vmem:[#allocation2 + $0x8] sm:$0xff] %vm253, %v1108
  %1125 = vst.msk [vmem:[#allocation2 + $0x10] sm:$0xff] %vm253, %v1109
  %1126 = vst.msk [vmem:[#allocation2 + $0x18] sm:$0xff] %vm253, %v1110
  %1127 = vst.msk [vmem:[#allocation2 + $0x20] sm:$0xff] %vm253, %v1111
  %1128 = vst.msk [vmem:[#allocation2 + $0x28] sm:$0xff] %vm253, %v1112
  %1129 = vst.msk [vmem:[#allocation2 + $0x30] sm:$0xff] %vm253, %v1113
  %1130 = vst.msk [vmem:[#allocation2 + $0x38] sm:$0xff] %vm253, %v1114
  %1131 = vst.msk [vmem:[#allocation2 + $0x40] sm:$0xff] %vm253, %v1115
  %1132 = vst.msk [vmem:[#allocation2 + $0x48] sm:$0xff] %vm253, %v1116
  %1133 = vst.msk [vmem:[#allocation2 + $0x50] sm:$0xff] %vm253, %v1117
  %1134 = vst.msk [vmem:[#allocation2 + $0x58] sm:$0xff] %vm253, %v1118
  %1135 = vst.msk [vmem:[#allocation2 + $0x60] sm:$0xff] %vm253, %v1119
  %1136 = vst.msk [vmem:[#allocation2 + $0x68] sm:$0xff] %vm253, %v1120
  %1137 = vst.msk [vmem:[#allocation2 + $0x70] sm:$0xff] %vm253, %v1121
  %1138 = vst.msk [vmem:[#allocation2 + $0x78] sm:$0xff] %vm253, %v1122
  %v1139 = vld [vmem:[#allocation2] ss:$2 sm:$0xff]
  %s1140 = scalar_lea.vmem [#allocation2], 16
  %v1141 = vld [vmem:[%s1140] ss:$2 sm:$0xff]
  %s1142 = scalar_lea.vmem [#allocation2], 32
  %v1143 = vld [vmem:[%s1142] ss:$2 sm:$0xff]
  %s1144 = scalar_lea.vmem [#allocation2], 48
  %v1145 = vld [vmem:[%s1144] ss:$2 sm:$0xff]
  %s1146 = scalar_lea.vmem [#allocation2], 64
  %v1147 = vld [vmem:[%s1146] ss:$2 sm:$0xff]
  %s1148 = scalar_lea.vmem [#allocation2], 80
  %v1149 = vld [vmem:[%s1148] ss:$2 sm:$0xff]
  %s1150 = scalar_lea.vmem [#allocation2], 96
  %v1151 = vld [vmem:[%s1150] ss:$2 sm:$0xff]
  %s1152 = scalar_lea.vmem [#allocation2], 112
  %v1153 = vld [vmem:[%s1152] ss:$2 sm:$0xff]
  %s1154 = scalar_lea.vmem [#allocation2], 1
  %v1155 = vld [vmem:[%s1154] ss:$2 sm:$0xff]
  %s1156 = scalar_lea.vmem [#allocation2], 17
  %v1157 = vld [vmem:[%s1156] ss:$2 sm:$0xff]
  %s1158 = scalar_lea.vmem [#allocation2], 33
  %v1159 = vld [vmem:[%s1158] ss:$2 sm:$0xff]
  %s1160 = scalar_lea.vmem [#allocation2], 49
  %v1161 = vld [vmem:[%s1160] ss:$2 sm:$0xff]
  %s1162 = scalar_lea.vmem [#allocation2], 65
  %v1163 = vld [vmem:[%s1162] ss:$2 sm:$0xff]
  %s1164 = scalar_lea.vmem [#allocation2], 81
  %v1165 = vld [vmem:[%s1164] ss:$2 sm:$0xff]
  %s1166 = scalar_lea.vmem [#allocation2], 97
  %v1167 = vld [vmem:[%s1166] ss:$2 sm:$0xff]
  %s1168 = scalar_lea.vmem [#allocation2], 113
  %v1169 = vld [vmem:[%s1168] ss:$2 sm:$0xff]
  %v1178 = vrot.slane %v1155, 7
  %v1179 = vrot.slane %v1157, 7
  %v1180 = vsel %vm54, %v1178, %v1179
  %v1181 = vrot.slane %v1159, 7
  %v1182 = vsel %vm54, %v1179, %v1181
  %v1183 = vrot.slane %v1161, 7
  %v1184 = vsel %vm54, %v1181, %v1183
  %v1185 = vrot.slane %v1163, 7
  %v1186 = vrot.slane %v1165, 7
  %v1187 = vsel %vm54, %v1185, %v1186
  %v1188 = vrot.slane %v1167, 7
  %v1189 = vsel %vm54, %v1186, %v1188
  %v1190 = vrot.slane %v1169, 7
  %v1191 = vsel %vm54, %v1188, %v1190
  %v1200 = vsel %vm54, 0.0, %v1178
  %v1201 = vsel %vm54, 0.0, %v1185
  %v1210 = vrot.slane %v1139, 1
  %v1211 = vrot.slane %v1141, 1
  %v1212 = vsel %vm103, %v1210, %v1211
  %v1213 = vrot.slane %v1143, 1
  %v1214 = vsel %vm103, %v1211, %v1213
  %v1215 = vrot.slane %v1145, 1
  %v1216 = vsel %vm103, %v1213, %v1215
  %v1217 = vrot.slane %v1147, 1
  %v1218 = vrot.slane %v1149, 1
  %v1219 = vsel %vm103, %v1217, %v1218
  %v1220 = vrot.slane %v1151, 1
  %v1221 = vsel %vm103, %v1218, %v1220
  %v1222 = vrot.slane %v1153, 1
  %v1223 = vsel %vm103, %v1220, %v1222
  %v1226 = vsel %vm103, %v1215, 0.0
  %v1227 = vsel %vm103, %v1222, 0.0
  %1228 = vrot.lane.b32.xlu0 %v1139, 16
  %v1229 = vpop.permute.xlu0 %1228
  %1230 = vrot.lane.b32.xlu0 %v1141, 16
  %v1231 = vpop.permute.xlu0 %1230
  %1232 = vrot.lane.b32.xlu0 %v1143, 16
  %v1233 = vpop.permute.xlu0 %1232
  %1234 = vrot.lane.b32.xlu0 %v1145, 16
  %v1235 = vpop.permute.xlu0 %1234
  %1236 = vrot.lane.b32.xlu0 %v1147, 16
  %v1237 = vpop.permute.xlu0 %1236
  %1238 = vrot.lane.b32.xlu0 %v1149, 16
  %v1239 = vpop.permute.xlu0 %1238
  %1240 = vrot.lane.b32.xlu0 %v1151, 16
  %v1241 = vpop.permute.xlu0 %1240
  %1242 = vrot.lane.b32.xlu0 %v1153, 16
  %v1243 = vpop.permute.xlu0 %1242
  %1252 = vrot.lane.b32.xlu0 %v1155, 32
  %v1253 = vpop.permute.xlu0 %1252
  %1254 = vrot.lane.b32.xlu0 %v1157, 32
  %v1255 = vpop.permute.xlu0 %1254
  %1256 = vrot.lane.b32.xlu0 %v1159, 32
  %v1257 = vpop.permute.xlu0 %1256
  %1258 = vrot.lane.b32.xlu0 %v1161, 32
  %v1259 = vpop.permute.xlu0 %1258
  %1260 = vrot.lane.b32.xlu0 %v1163, 32
  %v1261 = vpop.permute.xlu0 %1260
  %1262 = vrot.lane.b32.xlu0 %v1165, 32
  %v1263 = vpop.permute.xlu0 %1262
  %1264 = vrot.lane.b32.xlu0 %v1167, 32
  %v1265 = vpop.permute.xlu0 %1264
  %1266 = vrot.lane.b32.xlu0 %v1169, 32
  %v1267 = vpop.permute.xlu0 %1266
  %1278 = vrot.lane.b32.xlu0 %v1212, 48
  %v1279 = vpop.permute.xlu0 %1278
  %1280 = vrot.lane.b32.xlu0 %v1214, 48
  %v1281 = vpop.permute.xlu0 %1280
  %1282 = vrot.lane.b32.xlu0 %v1216, 48
  %v1283 = vpop.permute.xlu0 %1282
  %1284 = vrot.lane.b32.xlu0 %v1226, 48
  %v1285 = vpop.permute.xlu0 %1284
  %1286 = vrot.lane.b32.xlu0 %v1219, 48
  %v1287 = vpop.permute.xlu0 %1286
  %1288 = vrot.lane.b32.xlu0 %v1221, 48
  %v1289 = vpop.permute.xlu0 %1288
  %1290 = vrot.lane.b32.xlu0 %v1223, 48
  %v1291 = vpop.permute.xlu0 %1290
  %1292 = vrot.lane.b32.xlu0 %v1227, 48
  %v1293 = vpop.permute.xlu0 %1292
  %v1302 = vsel %vm253, %v1200, %v1229
  %v1303 = vsel %vm253, %v1180, %v1231
  %v1304 = vsel %vm253, %v1182, %v1233
  %v1305 = vsel %vm253, %v1184, %v1235
  %v1306 = vsel %vm253, %v1201, %v1237
  %v1307 = vsel %vm253, %v1187, %v1239
  %v1308 = vsel %vm253, %v1189, %v1241
  %v1309 = vsel %vm253, %v1191, %v1243
  %v1310 = vsel %vm790, %v1302, %v1253
  %v1311 = vsel %vm790, %v1303, %v1255
  %v1312 = vsel %vm790, %v1304, %v1257
  %v1313 = vsel %vm790, %v1305, %v1259
  %v1314 = vsel %vm790, %v1306, %v1261
  %v1315 = vsel %vm790, %v1307, %v1263
  %v1316 = vsel %vm790, %v1308, %v1265
  %v1317 = vsel %vm790, %v1309, %v1267
  %v1318 = vsel %vm843, %v1310, %v1279
  %v1319 = vsel %vm843, %v1311, %v1281
  %v1320 = vsel %vm843, %v1312, %v1283
  %v1321 = vsel %vm843, %v1313, %v1285
  %v1322 = vsel %vm843, %v1314, %v1287
  %v1323 = vsel %vm843, %v1315, %v1289
  %v1324 = vsel %vm843, %v1316, %v1291
  %v1325 = vsel %vm843, %v1317, %v1293
  %v1326 = vpack.c.bf16 %v1319, %v1318
  %v1327 = vpack.c.bf16 %v1321, %v1320
  %v1328 = vpack.c.bf16 %v1323, %v1322
  %v1329 = vpack.c.bf16 %v1325, %v1324
  %v1330 = vld [vmem:[%s3] sm:$0xf]
  %v1331 = vld [vmem:[%s3 + $0x4] sm:$0xf]
  %v1332 = vld [vmem:[%s3 + $0x8] sm:$0xf]
  %v1333 = vld [vmem:[%s3 + $0xc] sm:$0xf]
  %v1334 = vld [vmem:[%s3 + $0x10] sm:$0xf]
  %v1335 = vld [vmem:[%s3 + $0x14] sm:$0xf]
  %v1336 = vld [vmem:[%s3 + $0x18] sm:$0xf]
  %v1337 = vld [vmem:[%s3 + $0x1c] sm:$0xf]
  %v1338 = vlaneseq
  %v1339 = vshrl.u32 %v1338, 7
  %v1340 = vsub.s32 6, %v1339
  %v1341 = vrot.slane %v21, %v1340
  %v1350 = vunpack.c.l.b16 %v1330
  %v1351 = vunpack.c.l.b16 %v1331
  %v1352 = vunpack.c.l.b16 %v1332
  %v1353 = vunpack.c.l.b16 %v1333
  %v1354 = vunpack.c.l.b16 %v1334
  %v1355 = vunpack.c.l.b16 %v1335
  %v1356 = vunpack.c.l.b16 %v1336
  %v1357 = vunpack.c.l.b16 %v1337
  %v1358 = vpack.c.b16 %v1351, %v1350
  %v1359 = vpack.c.b16 %v1353, %v1352
  %v1360 = vpack.c.b16 %v1355, %v1354
  %v1361 = vpack.c.b16 %v1357, %v1356
  %vm1366 = vcmask 523264
  %v1368 = vsel %vm1366, %v1326, 0
  %v1371 = vsel %vm1366, %v1327, 0
  %v1374 = vsel %vm1366, %v1328, 0
  %v1377 = vsel %vm1366, %v1329, 0
  %1379 = vmatprep.subr.bf16.mxu0 0
  %1380 = vmatpush1.bf16.msra.mxu0 %v1358
  %1381 = vmatprep.subr.bf16.mxu0 0
  %1382 = vmatpush1.bf16.msra.mxu0 %v1359
  %1383 = vmatprep.subr.bf16.mxu0 0
  %1384 = vmatpush1.bf16.msra.mxu0 %v1360
  %1385 = vmatprep.subr.bf16.mxu0 0
  %1386 = vmatpush1.bf16.msra.mxu0 %v1361
  %1387 = vmatprep.subr.bf16.mxu0 0
  %1388 = vmatpush1.bf16.msra.mxu0 0
  %1389 = vmatprep.subr.bf16.mxu0 0
  %1390 = vmatpush1.bf16.msra.mxu0 0
  %1391 = vmatprep.subr.bf16.mxu0 0
  %1392 = vmatpush1.bf16.msra.mxu0 0
  %1393 = vmatprep.subr.bf16.mxu0 0
  %1394 = vmatpush1.bf16.msra.mxu0 0
  %1395 = vmatprep.subr.bf16.mxu0 0
  %1396 = vmatpush1.bf16.msra.mxu0 0
  %1397 = vmatprep.subr.bf16.mxu0 0
  %1398 = vmatpush1.bf16.msra.mxu0 0
  %1399 = vmatprep.subr.bf16.mxu0 0
  %1400 = vmatpush1.bf16.msra.mxu0 0
  %1401 = vmatprep.subr.bf16.mxu0 0
  %1402 = vmatpush1.bf16.msra.mxu0 0
  %1403 = vmatprep.subr.bf16.mxu0 0
  %1404 = vmatpush1.bf16.msra.mxu0 0
  %1405 = vmatprep.subr.bf16.mxu0 0
  %1406 = vmatpush1.bf16.msra.mxu0 0
  %1407 = vmatprep.subr.bf16.mxu0 0
  %1408 = vmatpush1.bf16.msra.mxu0 0
  %1409 = vmatprep.subr.bf16.mxu0 0
  %1410 = vmatpush1.bf16.msra.mxu0 0
  %1411 = vmatprep.mubr.bf16.mxu0 0
  %1412 = vmatmul.mubr.bf16.gmra.mrb[0].mxu0 %v1368
  %v1413 = vpop.f32.mrb[0].mxu0
  %v1414 = vadd.f32 %v1341, %v1413
  %v1415 = vpop.f32.mrb[0].mxu0
  %v1416 = vpop.f32.mrb[0].mxu0
  %v1417 = vadd.f32 %v1341, %v1416
  %v1418 = vpop.f32.mrb[0].mxu0
  %1419 = vmatprep.mubr.bf16.mxu0 0
  %1420 = vmatmul.mubr.bf16.gmra.mrb[0].mxu0 %v1371
  %v1421 = vpop.f32.mrb[0].mxu0
  %v1422 = vadd.f32 %v1341, %v1421
  %v1423 = vpop.f32.mrb[0].mxu0
  %v1424 = vpop.f32.mrb[0].mxu0
  %v1425 = vadd.f32 %v1341, %v1424
  %v1426 = vpop.f32.mrb[0].mxu0
  %1427 = vmatprep.mubr.bf16.mxu0 0
  %1428 = vmatmul.mubr.bf16.gmra.mrb[0].mxu0 %v1374
  %v1429 = vpop.f32.mrb[0].mxu0
  %v1430 = vadd.f32 %v1341, %v1429
  %v1431 = vpop.f32.mrb[0].mxu0
  %v1432 = vpop.f32.mrb[0].mxu0
  %v1433 = vadd.f32 %v1341, %v1432
  %v1434 = vpop.f32.mrb[0].mxu0
  %1435 = vmatprep.mubr.bf16.mxu0 0
  %1436 = vmatmul.mubr.bf16.gmra.mrb[0].mxu0 %v1377
  %v1437 = vpop.f32.mrb[0].mxu0
  %v1438 = vadd.f32 %v1341, %v1437
  %v1439 = vpop.f32.mrb[0].mxu0
  %v1440 = vpop.f32.mrb[0].mxu0
  %v1441 = vadd.f32 %v1341, %v1440
  %v1442 = vpop.f32.mrb[0].mxu0
  %1443 = vdwg.mxu0
  %1444 = vst.msk [vmem:[%s5] sm:$0xff] %vm253, %v1414
  %1445 = vst.msk [vmem:[%s5 + $0x8] sm:$0xff] %vm253, %v1417
  %1446 = vst.msk [vmem:[%s5 + $0x10] sm:$0xff] %vm253, %v1422
  %1447 = vst.msk [vmem:[%s5 + $0x18] sm:$0xff] %vm253, %v1425
  %1448 = vst.msk [vmem:[%s5 + $0x20] sm:$0xff] %vm253, %v1430
  %1449 = vst.msk [vmem:[%s5 + $0x28] sm:$0xff] %vm253, %v1433
  %1450 = vst.msk [vmem:[%s5 + $0x30] sm:$0xff] %vm253, %v1438
  %1451 = vst.msk [vmem:[%s5 + $0x38] sm:$0xff] %vm253, %v1441
  // Predicated region
  $region22: #{block_forward.1} parent=0 // pred_check
    _
  $region23: #{block_forward.1} parent=0 // pred_check_branch
    %1453 = sbr.rel (0) target = $region25
  $region24: #{block_forward.1} parent=0 // pred_region
    _
  $region25: #{block_forward.1} parent=0 // pred_fallthru
    _
  // Predicated region
  $region26: #{block_forward.1} parent=0 // pred_check
    _
  $region27: #{block_forward.1} parent=0 // pred_check_branch
    %1455 = sbr.rel (0) target = $region29
  $region28: #{block_forward.1} parent=0 // pred_region
    _
  $region29: #{block_forward.1} parent=0 // pred_fallthru
    _

</llo_original>
